<compile_context>
chip_gen: v7x
topology: tpu7x:2x2x1
jax: 0.10.0
libtpu: 0.0.40
codegen_flags: <defaults>
</compile_context>

<pallas_src>
import jax
import jax.numpy as jnp
from jax.experimental import pallas as pl
from jax.experimental.pallas import tpu as pltpu

HIDDEN_SIZE = 128
_SUBLANE = 8            # second-to-last-dim alignment target
_MAX_BATCH_TILE = 256   # <= 256 so training batches give the grid >= 2 steps


def _round_up(n, m):
    return ((n + m - 1) // m) * m


def _pick_batch_tile(b_pad, max_tile=_MAX_BATCH_TILE):
    """Largest multiple of 8 (<= max_tile) dividing b_pad, preferring >= 2
    grid steps so the pipeline overlaps DMA with compute and v7x can shard the
    batch axis across both TensorCores."""
    if b_pad <= _SUBLANE:
        return b_pad
    limit = min(max_tile, max(_SUBLANE, (b_pad // 2) // _SUBLANE * _SUBLANE))
    tile = _SUBLANE
    for t in range(_SUBLANE, limit + 1, _SUBLANE):
        if b_pad % t == 0:
            tile = t
    return tile


# ---------------------------------------------------------------------------
# Kernel
# ---------------------------------------------------------------------------
def _qnet_kernel(x_ref, w1_ref, b1_ref, w2_ref, b2_ref, w3_ref, b3_ref, out_ref):
    # x tile: (TB, state_size) f32; weights bf16; biases f32; output f32.
    x = x_ref[...].astype(w1_ref.dtype)          # cast inside kernel, not wrapper

    # fc1 + ReLU  (bf16 operands -> f32 MXU accumulate; epilogue in f32)
    h1 = jnp.dot(x, w1_ref[...], preferred_element_type=jnp.float32) + b1_ref[...]
    h1 = jnp.maximum(h1, 0.0)

    # fc2 + ReLU
    h2 = (
        jnp.dot(h1.astype(w2_ref.dtype), w2_ref[...], preferred_element_type=jnp.float32)
        + b2_ref[...]
    )
    h2 = jnp.maximum(h2, 0.0)

    # fc3 (no activation) — narrow (TB, action_size) f32 store
    out_ref[...] = (
        jnp.dot(h2.astype(w3_ref.dtype), w3_ref[...], preferred_element_type=jnp.float32)
        + b3_ref[...]
    )


# ---------------------------------------------------------------------------
# Parameter handling
# ---------------------------------------------------------------------------
def init_params(key, state_size, action_size, hidden=HIDDEN_SIZE):
    """Deterministic init matching nn.Linear's default (uniform +-1/sqrt(fan_in)).

    Weights are stored as (in, out) so each layer is y = x @ W + b
    (== PyTorch x @ W.T + b with W of shape (out, in))."""
    def linear(key, fan_in, fan_out):
        kw, kb = jax.random.split(key)
        bound = 1.0 / jnp.sqrt(fan_in)
        w = jax.random.uniform(kw, (fan_in, fan_out), jnp.float32, -bound, bound)
        b = jax.random.uniform(kb, (1, fan_out), jnp.float32, -bound, bound)
        return w, b

    k1, k2, k3 = jax.random.split(key, 3)
    w1, b1 = linear(k1, state_size, hidden)
    w2, b2 = linear(k2, hidden, hidden)
    w3, b3 = linear(k3, hidden, action_size)
    return {"w1": w1, "b1": b1, "w2": w2, "b2": b2, "w3": w3, "b3": b3}


def prepare_params(params, compute_dtype=jnp.bfloat16):
    """One-time prep: cast weights to the MXU operand dtype.  No lane padding —
    full-dim blocks handle the narrow state/action dims.  Biases stay f32."""
    return {
        "w1": params["w1"].astype(compute_dtype),
        "b1": params["b1"].astype(jnp.float32),
        "w2": params["w2"].astype(compute_dtype),
        "b2": params["b2"].astype(jnp.float32),
        "w3": params["w3"].astype(compute_dtype),
        "b3": params["b3"].astype(jnp.float32),
    }


# ---------------------------------------------------------------------------
# Forward pass
# ---------------------------------------------------------------------------
def qnetwork_forward(x, kparams):
    """x: (B, state_size) f32.  kparams: output of prepare_params.
    Returns (B, action_size) f32 Q-values."""
    w1, b1 = kparams["w1"], kparams["b1"]
    w2, b2 = kparams["w2"], kparams["b2"]
    w3, b3 = kparams["w3"], kparams["b3"]

    batch, state_size = x.shape
    action_size = w3.shape[1]

    # Pad the batch only to the sublane (8); tile is a divisor of b_pad so no
    # padding cliffs and (when possible) the grid has >= 2 steps.
    b_pad = _round_up(batch, _SUBLANE)
    if b_pad != batch:
        x = jnp.pad(x, ((0, b_pad - batch), (0, 0)))
    tb = _pick_batch_tile(b_pad)
    grid = (b_pad // tb,)

    # Constant block index -> weights/biases stay resident in VMEM across steps.
    resident = lambda a: pl.BlockSpec(a.shape, lambda i: (0, 0))

    out = pl.pallas_call(
        _qnet_kernel,
        out_shape=jax.ShapeDtypeStruct((b_pad, action_size), jnp.float32),
        grid=grid,
        in_specs=[
            pl.BlockSpec((tb, state_size), lambda i: (i, 0)),  # x, narrow last dim
            resident(w1), resident(b1),
            resident(w2), resident(b2),
            resident(w3), resident(b3),
        ],
        out_specs=pl.BlockSpec((tb, action_size), lambda i: (i, 0)),
        compiler_params=pltpu.CompilerParams(dimension_semantics=("parallel",)),
    )(x, w1, b1, w2, b2, w3, b3)

    if b_pad != batch:
        out = out[:batch]
    return out


# ---------------------------------------------------------------------------
# Pure-JAX reference
# ---------------------------------------------------------------------------
def _reference_forward(x, p, matmul_dtype=jnp.float32):
    def mm(a, w):
        return jnp.dot(a.astype(matmul_dtype), w.astype(matmul_dtype),
                       preferred_element_type=jnp.float32)
    h1 = jnp.maximum(mm(x, p["w1"]) + p["b1"], 0.0)
    h2 = jnp.maximum(mm(h1, p["w2"]) + p["b2"], 0.0)
    return mm(h2, p["w3"]) + p["b3"]


if __name__ == "__main__":
    # Typical snake DQN shapes: 11-dim state, 3 actions; small batches.
    batch, state_size, action_size = 8, 11, 3

    key = jax.random.PRNGKey(0)
    k_params, k_x, k_x2 = jax.random.split(key, 3)

    params = init_params(k_params, state_size, action_size)
    kparams = prepare_params(params)

    # --- small "acting"-sized batch (single grid step) ---
    x = jax.random.normal(k_x, (batch, state_size), jnp.float32)
    out = jax.block_until_ready(qnetwork_forward(x, kparams))
    assert out.shape == (batch, action_size)

    # Tight check vs. a reference using the same bf16 matmul operands.
    ref_bf16 = _reference_forward(x, params, matmul_dtype=jnp.bfloat16)
    assert jnp.allclose(out, ref_bf16, atol=2e-3, rtol=2e-3), "mismatch vs. bf16 reference"
    # Loose sanity check vs. the full-f32 reference (bf16 operand rounding only).
    ref_f32 = _reference_forward(x, params)
    assert float(jnp.max(jnp.abs(out - ref_f32))) < 0.1, "drift vs. f32 reference too large"

    # --- ragged batch (20 -> padded to 24, tb=8, 3 grid steps) ---
    x2 = jax.random.normal(k_x2, (20, state_size), jnp.float32)
    out2 = jax.block_until_ready(qnetwork_forward(x2, kparams))
    ref2 = _reference_forward(x2, params, matmul_dtype=jnp.bfloat16)
    assert out2.shape == (20, action_size)
    assert jnp.allclose(out2, ref2, atol=2e-3, rtol=2e-3), "ragged-batch mismatch"

    print("KERNEL_OK")
</pallas_src>

<mosaic_0001>
module attributes {stable_mosaic.version = 11 : i64} {
  func.func @_qnet_kernel(%arg0: i32, %arg1: memref<8x11xf32, #tpu.memory_space<vmem>>, %arg2: memref<11x128xbf16, #tpu.memory_space<vmem>>, %arg3: memref<1x128xf32, #tpu.memory_space<vmem>>, %arg4: memref<128x128xbf16, #tpu.memory_space<vmem>>, %arg5: memref<1x128xf32, #tpu.memory_space<vmem>>, %arg6: memref<128x3xbf16, #tpu.memory_space<vmem>>, %arg7: memref<1x3xf32, #tpu.memory_space<vmem>>, %arg8: memref<8x3xf32, #tpu.memory_space<vmem>>) attributes {dimension_semantics = [#tpu.dimension_semantics<parallel>], iteration_bounds = array<i64: 1>, scalar_prefetch = 0 : i64, scratch_operands = 0 : i64, tpu.core_type = #tpu.core_type<tc>, window_params = [{transform_indices = @transform_0, window_bounds = array<i64: 8, 11>}, {pipeline_mode = #tpu.pipeline_mode<synchronous>, transform_indices = @transform_1, window_bounds = array<i64: 11, 128>}, {pipeline_mode = #tpu.pipeline_mode<synchronous>, transform_indices = @transform_2, window_bounds = array<i64: 1, 128>}, {pipeline_mode = #tpu.pipeline_mode<synchronous>, transform_indices = @transform_3, window_bounds = array<i64: 128, 128>}, {pipeline_mode = #tpu.pipeline_mode<synchronous>, transform_indices = @transform_4, window_bounds = array<i64: 1, 128>}, {pipeline_mode = #tpu.pipeline_mode<synchronous>, transform_indices = @transform_5, window_bounds = array<i64: 128, 3>}, {pipeline_mode = #tpu.pipeline_mode<synchronous>, transform_indices = @transform_6, window_bounds = array<i64: 1, 3>}, {transform_indices = @transform_7, window_bounds = array<i64: 8, 3>}]} {
    %c0 = arith.constant 0 : index
    %c0_0 = arith.constant 0 : index
    %0 = vector.load %arg1[%c0, %c0_0] : memref<8x11xf32, #tpu.memory_space<vmem>>, vector<8x11xf32>
    %1 = arith.truncf %0 : vector<8x11xf32> to vector<8x11xbf16>
    %c0_1 = arith.constant 0 : index
    %c0_2 = arith.constant 0 : index
    %2 = vector.load %arg2[%c0_1, %c0_2] : memref<11x128xbf16, #tpu.memory_space<vmem>>, vector<11x128xbf16>
    %cst = arith.constant dense<0.000000e+00> : vector<8x128xf32>
    %3 = tpu.matmul %1, %2, %cst {dimension_numbers = #tpu.dot_dimension_numbers<[1], [0], [0], [1], [0, 0, 1, 1], [], []>} : vector<8x11xbf16>, vector<11x128xbf16>, vector<8x128xf32> -> vector<8x128xf32>
    %c0_3 = arith.constant 0 : index
    %c0_4 = arith.constant 0 : index
    %4 = vector.load %arg3[%c0_3, %c0_4] : memref<1x128xf32, #tpu.memory_space<vmem>>, vector<1x128xf32>
    %5 = vector.broadcast %4 : vector<1x128xf32> to vector<8x128xf32>
    %6 = arith.addf %3, %5 : vector<8x128xf32>
    %cst_5 = arith.constant 0.000000e+00 : f32
    %7 = vector.broadcast %cst_5 : f32 to vector<8x128xf32>
    %8 = arith.maximumf %6, %7 : vector<8x128xf32>
    %9 = arith.truncf %8 : vector<8x128xf32> to vector<8x128xbf16>
    %c0_6 = arith.constant 0 : index
    %c0_7 = arith.constant 0 : index
    %10 = vector.load %arg4[%c0_6, %c0_7] : memref<128x128xbf16, #tpu.memory_space<vmem>>, vector<128x128xbf16>
    %cst_8 = arith.constant dense<0.000000e+00> : vector<8x128xf32>
    %11 = tpu.matmul %9, %10, %cst_8 {dimension_numbers = #tpu.dot_dimension_numbers<[1], [0], [0], [1], [0, 0, 1, 1], [], []>} : vector<8x128xbf16>, vector<128x128xbf16>, vector<8x128xf32> -> vector<8x128xf32>
    %c0_9 = arith.constant 0 : index
    %c0_10 = arith.constant 0 : index
    %12 = vector.load %arg5[%c0_9, %c0_10] : memref<1x128xf32, #tpu.memory_space<vmem>>, vector<1x128xf32>
    %13 = vector.broadcast %12 : vector<1x128xf32> to vector<8x128xf32>
    %14 = arith.addf %11, %13 : vector<8x128xf32>
    %cst_11 = arith.constant 0.000000e+00 : f32
    %15 = vector.broadcast %cst_11 : f32 to vector<8x128xf32>
    %16 = arith.maximumf %14, %15 : vector<8x128xf32>
    %17 = arith.truncf %16 : vector<8x128xf32> to vector<8x128xbf16>
    %c0_12 = arith.constant 0 : index
    %c0_13 = arith.constant 0 : index
    %18 = vector.load %arg6[%c0_12, %c0_13] : memref<128x3xbf16, #tpu.memory_space<vmem>>, vector<128x3xbf16>
    %cst_14 = arith.constant dense<0.000000e+00> : vector<8x3xf32>
    %19 = tpu.matmul %17, %18, %cst_14 {dimension_numbers = #tpu.dot_dimension_numbers<[1], [0], [0], [1], [0, 0, 1, 1], [], []>} : vector<8x128xbf16>, vector<128x3xbf16>, vector<8x3xf32> -> vector<8x3xf32>
    %c0_15 = arith.constant 0 : index
    %c0_16 = arith.constant 0 : index
    %20 = vector.load %arg7[%c0_15, %c0_16] : memref<1x3xf32, #tpu.memory_space<vmem>>, vector<1x3xf32>
    %21 = vector.broadcast %20 : vector<1x3xf32> to vector<8x3xf32>
    %22 = arith.addf %19, %21 : vector<8x3xf32>
    %c0_17 = arith.constant 0 : index
    %c0_18 = arith.constant 0 : index
    %23 = vector.load %arg8[%c0_17, %c0_18] : memref<8x3xf32, #tpu.memory_space<vmem>>, vector<8x3xf32>
    tpu.vector_store %arg8[%c0_17, %c0_18], %22 {strides = array<i32>} : memref<8x3xf32, #tpu.memory_space<vmem>>, vector<8x3xf32>,
    return
  }
  func.func @transform_0(%arg0: i32) -> (i32, i32) {
    %c0_i32 = arith.constant 0 : i32
    %c0_i32_0 = arith.constant 0 : i32
    return %arg0, %c0_i32 : i32, i32
  }
  func.func @transform_1(%arg0: i32) -> (i32, i32) {
    %c0_i32 = arith.constant 0 : i32
    %c0_i32_0 = arith.constant 0 : i32
    %c0_i32_1 = arith.constant 0 : i32
    return %c0_i32, %c0_i32_0 : i32, i32
  }
  func.func @transform_2(%arg0: i32) -> (i32, i32) {
    %c0_i32 = arith.constant 0 : i32
    %c0_i32_0 = arith.constant 0 : i32
    %c0_i32_1 = arith.constant 0 : i32
    return %c0_i32, %c0_i32_0 : i32, i32
  }
  func.func @transform_3(%arg0: i32) -> (i32, i32) {
    %c0_i32 = arith.constant 0 : i32
    %c0_i32_0 = arith.constant 0 : i32
    %c0_i32_1 = arith.constant 0 : i32
    return %c0_i32, %c0_i32_0 : i32, i32
  }
  func.func @transform_4(%arg0: i32) -> (i32, i32) {
    %c0_i32 = arith.constant 0 : i32
    %c0_i32_0 = arith.constant 0 : i32
    %c0_i32_1 = arith.constant 0 : i32
    return %c0_i32, %c0_i32_0 : i32, i32
  }
  func.func @transform_5(%arg0: i32) -> (i32, i32) {
    %c0_i32 = arith.constant 0 : i32
    %c0_i32_0 = arith.constant 0 : i32
    %c0_i32_1 = arith.constant 0 : i32
    return %c0_i32, %c0_i32_0 : i32, i32
  }
  func.func @transform_6(%arg0: i32) -> (i32, i32) {
    %c0_i32 = arith.constant 0 : i32
    %c0_i32_0 = arith.constant 0 : i32
    %c0_i32_1 = arith.constant 0 : i32
    return %c0_i32, %c0_i32_0 : i32, i32
  }
  func.func @transform_7(%arg0: i32) -> (i32, i32) {
    %c0_i32 = arith.constant 0 : i32
    %c0_i32_0 = arith.constant 0 : i32
    return %arg0, %c0_i32 : i32, i32
  }
}

</mosaic_0001>

<llo_original>
// kernel: tpu_custom_call.1
$region0: #{tpu_custom_call.1}
  #allocation0 [shape = 'u32[]', space=smem, size = 0x4, offset = 0x4, fixed_abs, tag = 'smem constant byte address 0x4 - core index']
  #allocation1 [shape = 'u32[144,128]{1,0:T(1,128)}', space=vmem, size = 0x12000, scoped, tag = 'internal scratch']
  %s0 = inlined_call_operand.vmem [shape: f32[8,11], index: 0, kind: input, shape index: {}]
  %s1 = inlined_call_operand.hbm [shape: bf16[11,128], index: 1, kind: input, shape index: {}]
  %s2 = inlined_call_operand.vmem [shape: f32[1,128], index: 2, kind: input, shape index: {}]
  %s3 = inlined_call_operand.vmem [shape: bf16[128,128], index: 3, kind: input, shape index: {}]
  %s4 = inlined_call_operand.vmem [shape: f32[1,128], index: 4, kind: input, shape index: {}]
  %s5 = inlined_call_operand.vmem [shape: bf16[128,3], index: 5, kind: input, shape index: {}]
  %s6 = inlined_call_operand.vmem [shape: f32[1,3], index: 6, kind: input, shape index: {}]
  %s7 = inlined_call_operand.vmem [shape: f32[8,3], index: 7, kind: output, shape index: {}]
  %s8 = sld [smem:[#allocation0]]
  $region42: #{tpu_custom_call.1} parent=0
    _
  %s10 = ssub.s32 1, %s8
  %s11 = scalar_select 0, %s10, %s8
  $region1: #{tpu_custom_call.1} parent=0
    #allocation2 [shape = 'u8[4096]{0}', space=vmem, size = 0x1000, scoped, tag = 'input window, operand 1, single buffered']
    #allocation3 [shape = 's32[1]{0}', space=sflag, size = 0x4, scoped, tag = 'scoped memory for tpu_custom_call.1']
    %12 = vsyncpa [#allocation3], 0
    // Predicated region
    $region2: #{tpu_custom_call.1} parent=1 // pred_check
      _
    $region3: #{tpu_custom_call.1} parent=1 // pred_check_branch
      %14 = sbr.rel (0) target = $region5
    $region4: #{tpu_custom_call.1} parent=1 // pred_region
      _
    $region5: #{tpu_custom_call.1} parent=1 // pred_fallthru
      _
    // Predicated region
    $region6: #{tpu_custom_call.1} parent=1 // pred_check
      _
    $region7: #{tpu_custom_call.1} parent=1 // pred_check_branch
      %16 = sbr.rel (0) target = $region9
    $region8: #{tpu_custom_call.1} parent=1 // pred_region
      %s18 = ssub.s32 128, 128
      %19 = vsyncadd [#allocation3], %s18
      %s20 = sshll.u32 [#allocation2], 4
      %s21 = int_to_ptr.vmem [resolvable:$true] %s20
      %26 = dma.hbm_to_vmem [thread:$0]  %s1, 128, %s21, [#allocation3], 64, 64, 4
    $region9: #{tpu_custom_call.1} parent=1 // pred_fallthru
      _
    // Predicated region
    $region10: #{tpu_custom_call.1} parent=1 // pred_check
      _
    $region11: #{tpu_custom_call.1} parent=1 // pred_check_branch
      %28 = sbr.rel (0) target = $region13
    $region12: #{tpu_custom_call.1} parent=1 // pred_region
      _
    $region13: #{tpu_custom_call.1} parent=1 // pred_fallthru
      _
    // Predicated region
    $region14: #{tpu_custom_call.1} parent=1 // pred_check
      _
    $region15: #{tpu_custom_call.1} parent=1 // pred_check_branch
      %30 = sbr.rel (0) target = $region17
    $region16: #{tpu_custom_call.1} parent=1 // pred_region
      _
    $region17: #{tpu_custom_call.1} parent=1 // pred_fallthru
      _
    // Predicated region
    $region18: #{tpu_custom_call.1} parent=1 // pred_check
      _
    $region19: #{tpu_custom_call.1} parent=1 // pred_check_branch
      %32 = sbr.rel (0) target = $region21
    $region20: #{tpu_custom_call.1} parent=1 // pred_region
      _
    $region21: #{tpu_custom_call.1} parent=1 // pred_fallthru
      _
    // Predicated region
    $region22: #{tpu_custom_call.1} parent=1 // pred_check
      _
    $region23: #{tpu_custom_call.1} parent=1 // pred_check_branch
      %34 = sbr.rel (0) target = $region25
    $region24: #{tpu_custom_call.1} parent=1 // pred_region
      _
    $region25: #{tpu_custom_call.1} parent=1 // pred_fallthru
      _
    // Predicated region
    $region26: #{tpu_custom_call.1} parent=1 // pred_check
      _
    $region27: #{tpu_custom_call.1} parent=1 // pred_check_branch
      %36 = sbr.rel (0) target = $region29
    $region28: #{tpu_custom_call.1} parent=1 // pred_region
      _
    $region29: #{tpu_custom_call.1} parent=1 // pred_fallthru
      _
    // Predicated region
    $region30: #{tpu_custom_call.1} parent=1 // pred_check
      _
    $region31: #{tpu_custom_call.1} parent=1 // pred_check_branch
      %38 = sbr.rel (0) target = $region33
    $region32: #{tpu_custom_call.1} parent=1 // pred_region
      %39 = dma.done [#allocation3], 128
    $region33: #{tpu_custom_call.1} parent=1 // pred_fallthru
      _
    %v41 = vld [vmem:[%s0] sm:$0xff]
    %v42 = vpack.c.bf16 %v41, %v41
    %v43 = vld [vmem:[#allocation2] sm:$0xf]
    %v44 = vld [vmem:[#allocation2 + $0x4] sm:$0x3]
    %v45 = vld [vmem:[%s2] sm:$0x1]
    %v47 = vlaneseq
    %v48 = vshrl.u32 %v47, 7
    %v49 = vsub.s32 0, %v48
    %v50 = vrot.slane %v45, %v49
    %v54 = vunpack.c.l.b16 %v43
    %v55 = vunpack.c.l.b16 %v44
    %v56 = vpack.c.b16 %v55, %v54
    %vm57 = vcmask 89088
    %v59 = vsel %vm57, %v42, 0
    %vm61 = vcmask 1044480
    %vm62 = vcmask 1045504
    %v63 = vsel %vm61, 4294967295, 65535
    %v64 = vsel %vm62, %v63, 0
    %v66 = vand.u32 %v56, %v64
    %68 = vmatprep.subr.bf16.mxu0 0
    %69 = vmatpush1.bf16.msra.mxu0 %v66
    %70 = vmatprep.subr.bf16.mxu0 0
    %71 = vmatpush1.bf16.msra.mxu0 0
    %72 = vmatprep.subr.bf16.mxu0 0
    %73 = vmatpush1.bf16.msra.mxu0 0
    %74 = vmatprep.subr.bf16.mxu0 0
    %75 = vmatpush1.bf16.msra.mxu0 0
    %76 = vmatprep.subr.bf16.mxu0 0
    %77 = vmatpush1.bf16.msra.mxu0 0
    %78 = vmatprep.subr.bf16.mxu0 0
    %79 = vmatpush1.bf16.msra.mxu0 0
    %80 = vmatprep.subr.bf16.mxu0 0
    %81 = vmatpush1.bf16.msra.mxu0 0
    %82 = vmatprep.subr.bf16.mxu0 0
    %83 = vmatpush1.bf16.msra.mxu0 0
    %84 = vmatprep.subr.bf16.mxu0 0
    %85 = vmatpush1.bf16.msra.mxu0 0
    %86 = vmatprep.subr.bf16.mxu0 0
    %87 = vmatpush1.bf16.msra.mxu0 0
    %88 = vmatprep.subr.bf16.mxu0 0
    %89 = vmatpush1.bf16.msra.mxu0 0
    %90 = vmatprep.subr.bf16.mxu0 0
    %91 = vmatpush1.bf16.msra.mxu0 0
    %92 = vmatprep.subr.bf16.mxu0 0
    %93 = vmatpush1.bf16.msra.mxu0 0
    %94 = vmatprep.subr.bf16.mxu0 0
    %95 = vmatpush1.bf16.msra.mxu0 0
    %96 = vmatprep.subr.bf16.mxu0 0
    %97 = vmatpush1.bf16.msra.mxu0 0
    %98 = vmatprep.subr.bf16.mxu0 0
    %99 = vmatpush1.bf16.msra.mxu0 0
    %100 = vmatprep.mubr.bf16.mxu0 0
    %101 = vmatmul.mubr.bf16.gmra.mrb[0].mxu0 %v59
    %v102 = vpop.f32.mrb[0].mxu0
    %v103 = vadd.f32 %v50, %v102
    %v104 = vpop.f32.mrb[0].mxu0
    %v105 = vpop.f32.mrb[0].mxu0
    %v106 = vpop.f32.mrb[0].mxu0
    %107 = vdwg.mxu0
    %v108 = vmax.f32 %v103, 0.0
    %v109 = vpack.c.bf16 %v108, %v108
    %v110 = vld [vmem:[%s3] sm:$0xf]
    %v111 = vld [vmem:[%s3 + $0x4] sm:$0xf]
    %v112 = vld [vmem:[%s3 + $0x8] sm:$0xf]
    %v113 = vld [vmem:[%s3 + $0xc] sm:$0xf]
    %v114 = vld [vmem:[%s3 + $0x10] sm:$0xf]
    %v115 = vld [vmem:[%s3 + $0x14] sm:$0xf]
    %v116 = vld [vmem:[%s3 + $0x18] sm:$0xf]
    %v117 = vld [vmem:[%s3 + $0x1c] sm:$0xf]
    %v118 = vld [vmem:[%s3 + $0x20] sm:$0xf]
    %v119 = vld [vmem:[%s3 + $0x24] sm:$0xf]
    %v120 = vld [vmem:[%s3 + $0x28] sm:$0xf]
    %v121 = vld [vmem:[%s3 + $0x2c] sm:$0xf]
    %v122 = vld [vmem:[%s3 + $0x30] sm:$0xf]
    %v123 = vld [vmem:[%s3 + $0x34] sm:$0xf]
    %v124 = vld [vmem:[%s3 + $0x38] sm:$0xf]
    %v125 = vld [vmem:[%s3 + $0x3c] sm:$0xf]
    %v126 = vld [vmem:[%s4] sm:$0x1]
    %v128 = vlaneseq
    %v129 = vshrl.u32 %v128, 7
    %v130 = vsub.s32 0, %v129
    %v131 = vrot.slane %v126, %v130
    %v149 = vunpack.c.l.b16 %v110
    %v150 = vunpack.c.l.b16 %v111
    %v151 = vunpack.c.l.b16 %v112
    %v152 = vunpack.c.l.b16 %v113
    %v153 = vunpack.c.l.b16 %v114
    %v154 = vunpack.c.l.b16 %v115
    %v155 = vunpack.c.l.b16 %v116
    %v156 = vunpack.c.l.b16 %v117
    %v157 = vunpack.c.l.b16 %v118
    %v158 = vunpack.c.l.b16 %v119
    %v159 = vunpack.c.l.b16 %v120
    %v160 = vunpack.c.l.b16 %v121
    %v161 = vunpack.c.l.b16 %v122
    %v162 = vunpack.c.l.b16 %v123
    %v163 = vunpack.c.l.b16 %v124
    %v164 = vunpack.c.l.b16 %v125
    %v165 = vpack.c.b16 %v150, %v149
    %v166 = vpack.c.b16 %v152, %v151
    %v167 = vpack.c.b16 %v154, %v153
    %v168 = vpack.c.b16 %v156, %v155
    %v169 = vpack.c.b16 %v158, %v157
    %v170 = vpack.c.b16 %v160, %v159
    %v171 = vpack.c.b16 %v162, %v161
    %v172 = vpack.c.b16 %v164, %v163
    %181 = vmatprep.subr.bf16.mxu0 0
    %182 = vmatpush1.bf16.msra.mxu0 %v165
    %183 = vmatprep.subr.bf16.mxu0 0
    %184 = vmatpush1.bf16.msra.mxu0 %v166
    %185 = vmatprep.subr.bf16.mxu0 0
    %186 = vmatpush1.bf16.msra.mxu0 %v167
    %187 = vmatprep.subr.bf16.mxu0 0
    %188 = vmatpush1.bf16.msra.mxu0 %v168
    %189 = vmatprep.subr.bf16.mxu0 0
    %190 = vmatpush1.bf16.msra.mxu0 %v169
    %191 = vmatprep.subr.bf16.mxu0 0
    %192 = vmatpush1.bf16.msra.mxu0 %v170
    %193 = vmatprep.subr.bf16.mxu0 0
    %194 = vmatpush1.bf16.msra.mxu0 %v171
    %195 = vmatprep.subr.bf16.mxu0 0
    %196 = vmatpush1.bf16.msra.mxu0 %v172
    %197 = vmatprep.subr.bf16.mxu0 0
    %198 = vmatpush1.bf16.msra.mxu0 0
    %199 = vmatprep.subr.bf16.mxu0 0
    %200 = vmatpush1.bf16.msra.mxu0 0
    %201 = vmatprep.subr.bf16.mxu0 0
    %202 = vmatpush1.bf16.msra.mxu0 0
    %203 = vmatprep.subr.bf16.mxu0 0
    %204 = vmatpush1.bf16.msra.mxu0 0
    %205 = vmatprep.subr.bf16.mxu0 0
    %206 = vmatpush1.bf16.msra.mxu0 0
    %207 = vmatprep.subr.bf16.mxu0 0
    %208 = vmatpush1.bf16.msra.mxu0 0
    %209 = vmatprep.subr.bf16.mxu0 0
    %210 = vmatpush1.bf16.msra.mxu0 0
    %211 = vmatprep.subr.bf16.mxu0 0
    %212 = vmatpush1.bf16.msra.mxu0 0
    %213 = vmatprep.mubr.bf16.mxu0 0
    %214 = vmatmul.mubr.bf16.gmra.mrb[0].mxu0 %v109
    %v215 = vpop.f32.mrb[0].mxu0
    %v216 = vadd.f32 %v131, %v215
    %v217 = vpop.f32.mrb[0].mxu0
    %v218 = vpop.f32.mrb[0].mxu0
    %v219 = vpop.f32.mrb[0].mxu0
    %220 = vdwg.mxu0
    %v221 = vmax.f32 %v216, 0.0
    %v222 = vpack.c.bf16 %v221, %v221
    %v223 = vld [vmem:[%s5] sm:$0xf]
    %v224 = vld [vmem:[%s5 + $0x4] sm:$0xf]
    %v225 = vld [vmem:[%s5 + $0x8] sm:$0xf]
    %v226 = vld [vmem:[%s5 + $0xc] sm:$0xf]
    %v227 = vld [vmem:[%s5 + $0x10] sm:$0xf]
    %v228 = vld [vmem:[%s5 + $0x14] sm:$0xf]
    %v229 = vld [vmem:[%s5 + $0x18] sm:$0xf]
    %v230 = vld [vmem:[%s5 + $0x1c] sm:$0xf]
    %v231 = vld [vmem:[%s5 + $0x20] sm:$0xf]
    %v232 = vld [vmem:[%s5 + $0x24] sm:$0xf]
    %v233 = vld [vmem:[%s5 + $0x28] sm:$0xf]
    %v234 = vld [vmem:[%s5 + $0x2c] sm:$0xf]
    %v235 = vld [vmem:[%s5 + $0x30] sm:$0xf]
    %v236 = vld [vmem:[%s5 + $0x34] sm:$0xf]
    %v237 = vld [vmem:[%s5 + $0x38] sm:$0xf]
    %v238 = vld [vmem:[%s5 + $0x3c] sm:$0xf]
    %v239 = vld [vmem:[%s6] sm:$0x1]
    %v241 = vlaneseq
    %v242 = vshrl.u32 %v241, 7
    %v243 = vsub.s32 0, %v242
    %v244 = vrot.slane %v239, %v243
    %v262 = vunpack.c.l.b16 %v223
    %v263 = vunpack.c.l.b16 %v224
    %v264 = vunpack.c.l.b16 %v225
    %v265 = vunpack.c.l.b16 %v226
    %v266 = vunpack.c.l.b16 %v227
    %v267 = vunpack.c.l.b16 %v228
    %v268 = vunpack.c.l.b16 %v229
    %v269 = vunpack.c.l.b16 %v230
    %v270 = vunpack.c.l.b16 %v231
    %v271 = vunpack.c.l.b16 %v232
    %v272 = vunpack.c.l.b16 %v233
    %v273 = vunpack.c.l.b16 %v234
    %v274 = vunpack.c.l.b16 %v235
    %v275 = vunpack.c.l.b16 %v236
    %v276 = vunpack.c.l.b16 %v237
    %v277 = vunpack.c.l.b16 %v238
    %v278 = vpack.c.b16 %v263, %v262
    %v279 = vpack.c.b16 %v265, %v264
    %v280 = vpack.c.b16 %v267, %v266
    %v281 = vpack.c.b16 %v269, %v268
    %v282 = vpack.c.b16 %v271, %v270
    %v283 = vpack.c.b16 %v273, %v272
    %v284 = vpack.c.b16 %v275, %v274
    %v285 = vpack.c.b16 %v277, %v276
    %294 = vmatprep.subr.bf16.mxu0 0
    %295 = vmatpush1.bf16.msra.mxu0 %v278
    %296 = vmatprep.subr.bf16.mxu0 0
    %297 = vmatpush1.bf16.msra.mxu0 %v279
    %298 = vmatprep.subr.bf16.mxu0 0
    %299 = vmatpush1.bf16.msra.mxu0 %v280
    %300 = vmatprep.subr.bf16.mxu0 0
    %301 = vmatpush1.bf16.msra.mxu0 %v281
    %302 = vmatprep.subr.bf16.mxu0 0
    %303 = vmatpush1.bf16.msra.mxu0 %v282
    %304 = vmatprep.subr.bf16.mxu0 0
    %305 = vmatpush1.bf16.msra.mxu0 %v283
    %306 = vmatprep.subr.bf16.mxu0 0
    %307 = vmatpush1.bf16.msra.mxu0 %v284
    %308 = vmatprep.subr.bf16.mxu0 0
    %309 = vmatpush1.bf16.msra.mxu0 %v285
    %310 = vmatprep.subr.bf16.mxu0 0
    %311 = vmatpush1.bf16.msra.mxu0 0
    %312 = vmatprep.subr.bf16.mxu0 0
    %313 = vmatpush1.bf16.msra.mxu0 0
    %314 = vmatprep.subr.bf16.mxu0 0
    %315 = vmatpush1.bf16.msra.mxu0 0
    %316 = vmatprep.subr.bf16.mxu0 0
    %317 = vmatpush1.bf16.msra.mxu0 0
    %318 = vmatprep.subr.bf16.mxu0 0
    %319 = vmatpush1.bf16.msra.mxu0 0
    %320 = vmatprep.subr.bf16.mxu0 0
    %321 = vmatpush1.bf16.msra.mxu0 0
    %322 = vmatprep.subr.bf16.mxu0 0
    %323 = vmatpush1.bf16.msra.mxu0 0
    %324 = vmatprep.subr.bf16.mxu0 0
    %325 = vmatpush1.bf16.msra.mxu0 0
    %326 = vmatprep.mubr.bf16.mxu0 0
    %327 = vmatmul.mubr.bf16.gmra.mrb[0].mxu0 %v222
    %v328 = vpop.f32.mrb[0].mxu0
    %v329 = vadd.f32 %v244, %v328
    %v330 = vpop.f32.mrb[0].mxu0
    %v331 = vpop.f32.mrb[0].mxu0
    %v332 = vpop.f32.mrb[0].mxu0
    %333 = vdwg.mxu0
    %vm334 = vcmask 23552
    %335 = vst.msk [vmem:[%s7] sm:$0xff] %vm334, %v329
    // Predicated region
    $region34: #{tpu_custom_call.1} parent=1 // pred_check
      _
    $region35: #{tpu_custom_call.1} parent=1 // pred_check_branch
      %337 = sbr.rel (0) target = $region37
    $region36: #{tpu_custom_call.1} parent=1 // pred_region
      _
    $region37: #{tpu_custom_call.1} parent=1 // pred_fallthru
      _
    // Predicated region
    $region38: #{tpu_custom_call.1} parent=1 // pred_check
      _
    $region39: #{tpu_custom_call.1} parent=1 // pred_check_branch
      %339 = sbr.rel (0) target = $region41
    $region40: #{tpu_custom_call.1} parent=1 // pred_region
      _
    $region41: #{tpu_custom_call.1} parent=1 // pred_fallthru
      _
    %340 = vsyncpa [#allocation3], 1

</llo_original>
